<compile_context>
chip_gen: v5e
topology: v5e:2x2
jax: 0.10.0
libtpu: 0.0.40
codegen_flags: <defaults>
</compile_context>

<pallas_src>
import functools

import jax
import jax.numpy as jnp
from jax import lax
from jax.experimental import pallas as pl
from jax.experimental.pallas import tpu as pltpu

_LANES = 128


def _round_up(a, b):
    return ((a + b - 1) // b) * b


def _vmem_capacity_bytes():
    try:
        return int(pltpu.get_tpu_info().vmem_capacity_bytes)
    except Exception:
        return 64 << 20  # conservative fallback (v7x-sized VMEM)


def _default_tm_target():
    # Row-tile targets near each generation's compute/memory crossover (flops per weight
    # byte): v5e ~240, v7x ~310 (but only 64 MiB VMEM), v6e ~680.
    try:
        kind = jax.devices()[0].device_kind.lower()
    except Exception:
        return 256
    if "v6" in kind:
        return 512
    return 256


def _lm_head_topk_kernel(x_ref, g_ref, w_ref, tok_ref,
                         xn_ref, lmax_ref, lidx_ref, *,
                         eps, tv, tr, cw, v_actual, v_padded):
    vi = pl.program_id(1)
    tm = xn_ref.shape[0]

    # First vocab tile of this row block: RMSNorm once (f32 accumulation), init running
    # per-lane max / first-occurrence index.
    @pl.when(vi == 0)
    def _():
        x = x_ref[...].astype(jnp.float32)
        var = jnp.mean(x * x, axis=-1, keepdims=True)
        xn = x * lax.rsqrt(var + eps) * g_ref[...].astype(jnp.float32)
        xn_ref[...] = xn.astype(xn_ref.dtype)
        lmax_ref[...] = jnp.full(lmax_ref.shape, -jnp.inf, lmax_ref.dtype)
        lidx_ref[...] = jnp.zeros(lidx_ref.shape, lidx_ref.dtype)

    lane = lax.broadcasted_iota(jnp.int32, (tr, _LANES), 1)
    base = vi * tv
    needs_mask = v_padded != v_actual   # static: only emit the index mask when V was padded

    # Row sub-blocks (tr rows) keep the (tr,128) max/idx carries register-resident; the
    # scratch refs are loaded/stored ONCE per vocab tile (not per 128-lane chunk).  The
    # matmul is chunked by cw columns and fused with the max/idx update so the f32 logits
    # never materialize a full (tm, tv) tile in VMEM.
    for r in range(tm // tr):
        rs = slice(r * tr, (r + 1) * tr)
        xn_r = xn_ref[rs, :]
        lmax = lmax_ref[rs, :]
        lidx = lidx_ref[rs, :]
        for c in range(tv // cw):
            # (tr, H) . (cw, H) contracting H ("NT" matmul) -> (tr, cw), f32 accumulation.
            logits = lax.dot_general(
                xn_r, w_ref[c * cw:(c + 1) * cw, :],
                dimension_numbers=(((1,), (1,)), ((), ())),
                preferred_element_type=jnp.float32)
            for lc in range(cw // _LANES):
                chunk = logits[:, lc * _LANES:(lc + 1) * _LANES]
                col = lane + (base + c * cw + lc * _LANES)
                # Strict '>' keeps the earliest (smallest) index on ties, matching torch.
                better = chunk > lmax
                if needs_mask:
                    better = jnp.logical_and(better, col < v_actual)
                lidx = jnp.where(better, col, lidx)
                lmax = jnp.where(better, chunk, lmax)
        lmax_ref[rs, :] = lmax
        lidx_ref[rs, :] = lidx

    # Last vocab tile: single 128 -> 1 cross-lane reduction; first occurrence wins ties.
    @pl.when(vi == pl.num_programs(1) - 1)
    def _():
        lmax = lmax_ref[...]
        lidx = lidx_ref[...]
        gmax = jnp.max(lmax, axis=-1, keepdims=True)
        big = jnp.iinfo(jnp.int32).max
        tok_ref[...] = jnp.min(jnp.where(lmax == gmax, lidx, big),
                               axis=-1, keepdims=True)


def lm_head_with_topk(hidden_states, norm_weight, lm_head_weight, *,
                      eps=1e-6, tm=None, tv=None, compute_dtype=None, w_buffers=2):
    """hidden_states: [B, S, H]; norm_weight: [H]; lm_head_weight: [V, H] (PyTorch layout,
    consumed as-is -- no transpose copy).  Returns argmax token indices [B, S, 1] (int32).

    Performance notes: the kernel is weight-streaming bound, so store lm_head_weight in
    bf16 at parameter-load time (or pass compute_dtype=jnp.bfloat16, which re-casts the
    weight in HBM on every call).  tm/tv default to generation-aware values derived from
    the device's VMEM capacity; sweep tv in [512, 2048] and (on v6e prefill) tm up to 512."""
    B, S, H = hidden_states.shape
    V, Hw = lm_head_weight.shape
    assert Hw == H and norm_weight.shape == (H,)
    M = B * S

    w = lm_head_weight                       # [V, H]: PyTorch layout, streamed directly
    if compute_dtype is not None and w.dtype != compute_dtype:
        # NOTE: prefer doing this cast once at parameter-load time.
        w = w.astype(compute_dtype)
    # Cast activations to the weight's compute dtype (halves the x DMA / x block for bf16
    # weights); RMSNorm still accumulates in f32 inside the kernel.
    x = hidden_states.reshape(M, H)
    if w.dtype == jnp.bfloat16 and x.dtype != jnp.bfloat16:
        x = x.astype(jnp.bfloat16)
    g = norm_weight.reshape(1, H)
    w_item = jnp.dtype(w.dtype).itemsize
    x_item = jnp.dtype(x.dtype).itemsize

    capacity = _vmem_capacity_bytes()

    # ---- Row tile: near the chip's flops/byte crossover; pad M up to a tile multiple
    #      (balanced tiles, each a multiple of 8) instead of falling back to tm = M.
    tm_target = _default_tm_target() if tm is None else max(int(tm), 1)
    if M <= tm_target:
        tm = M
    else:
        n_blocks = -(-M // tm_target)
        tm = _round_up(-(-M // n_blocks), 8)
    m_pad = _round_up(M, tm)
    if m_pad > M:
        x = jnp.pad(x, ((0, m_pad - M), (0, 0)))   # zero rows: RMSNorm stays finite

    # ---- Vocab tile: sized from the actual VMEM capacity (the W buffers dominate).
    if tv is None:
        budget = int(0.75 * capacity)
        reserve = 2 * tm * H * x_item + tm * H * w_item + tm * _LANES * 8 + (4 << 20)
        w_budget = max(budget - reserve, 2 << 20)
        tv = int(w_budget // (max(2, w_buffers) * H * w_item))
        tv = max(_LANES, min((tv // _LANES) * _LANES, 2048))
    tv = max(_LANES, (int(tv) // _LANES) * _LANES)
    tv = min(tv, _round_up(V, _LANES))
    v_pad = _round_up(V, tv)
    if v_pad > V:
        # TODO(synk): pad the weight once at parameter-load time to avoid this per-call HBM copy.
        w = jnp.pad(w, ((0, v_pad - V), (0, 0)))

    # Row sub-block / column chunk sizes used inside the kernel.
    tr = 128 if tm % 128 == 0 else tm
    cw = 512 if tv % 512 == 0 else (256 if tv % 256 == 0 else _LANES)

    w_spec = pl.BlockSpec((tv, H), lambda mi, vi: (vi, 0))
    if w_buffers > 2:
        # Deeper W-stream buffering (only pays off if xprof still shows DMA gaps, e.g. v7x).
        w_spec = pl.BlockSpec((tv, H), lambda mi, vi: (vi, 0),
                              pipeline_mode=pl.Buffered(w_buffers))

    est = (2 * tm * H * x_item                     # x double buffer
           + 2 * H * 4                             # gamma
           + max(2, w_buffers) * tv * H * w_item   # W buffers (the dominant term)
           + tm * H * w_item                       # xn scratch
           + tm * _LANES * 8                       # running per-lane max / idx
           + 2 * tm * 4                            # output
           + tr * H * w_item                       # xn row sub-block operand
           + 2 * tr * cw * 4)                      # live f32 logits chunk
    vmem_limit = int(est * 1.25) + (2 << 20)
    vmem_limit = max(vmem_limit, 24 << 20)
    vmem_limit = min(vmem_limit, int(0.95 * capacity))   # derived ceiling, no 48 MiB clamp

    kernel = functools.partial(_lm_head_topk_kernel, eps=eps, tv=tv, tr=tr, cw=cw,
                               v_actual=V, v_padded=v_pad)

    # NOTE: the (1,1)-contraction feeds the MXU with W in its [V, H] layout (an "NT"
    # matmul).  If a bundle dump ever shows a per-tile XLU transpose of the W tile,
    # switch to a pre-transposed [H, V] weight at parameter-load time.
    # TODO(synk): on v7x decode (m_pad // tm == 1) split the vocab range across the two
    # TensorCores (leading size-2 parallel grid axis producing partial (max, idx) pairs,
    # merged in a tiny epilogue) so the second core is not idle.
    tok = pl.pallas_call(
        kernel,
        out_shape=jax.ShapeDtypeStruct((m_pad, 1), jnp.int32),
        grid_spec=pltpu.PrefetchScalarGridSpec(
            num_scalar_prefetch=0,
            grid=(m_pad // tm, v_pad // tv),
            in_specs=[
                pl.BlockSpec((tm, H), lambda mi, vi: (mi, 0)),   # x rows
                pl.BlockSpec((1, H), lambda mi, vi: (0, 0)),     # norm gamma
                w_spec,                                          # W vocab tile [tv, H]
            ],
            out_specs=pl.BlockSpec((tm, 1), lambda mi, vi: (mi, 0)),
            scratch_shapes=[
                pltpu.VMEM((tm, H), w.dtype),           # normalized x (computed once / row block)
                pltpu.VMEM((tm, _LANES), jnp.float32),  # running per-lane max
                pltpu.VMEM((tm, _LANES), jnp.int32),    # running per-lane argmax
            ],
        ),
        compiler_params=pltpu.CompilerParams(
            dimension_semantics=("parallel", "arbitrary"),
            vmem_limit_bytes=vmem_limit),
    )(x, g, w)

    # TODO(synk): torch.topk returns int64 indices (and treats NaN as the max); this kernel
    # emits int32 and never selects NaN logits.
    return tok[:M].reshape(B, S, 1)


def _reference(hidden_states, norm_weight, lm_head_weight, eps=1e-6):
    x = hidden_states.astype(jnp.float32)
    var = jnp.mean(x * x, axis=-1, keepdims=True)
    xn = x * lax.rsqrt(var + eps) * norm_weight.astype(jnp.float32)
    logits = jnp.einsum('bsh,vh->bsv', xn, lm_head_weight.astype(jnp.float32),
                        precision=lax.Precision.HIGHEST)
    tok = jnp.argmax(logits, axis=-1, keepdims=True).astype(jnp.int32)
    return tok, logits


if __name__ == "__main__":
    key = jax.random.PRNGKey(0)

    def make(B, S, H, V, salt):
        ks = jax.random.split(jax.random.fold_in(key, salt), 3)
        hs = jax.random.normal(ks[0], (B, S, H), dtype=jnp.float32)
        g = 1.0 + 0.02 * jax.random.normal(ks[1], (H,), dtype=jnp.float32)
        w = 0.05 * jax.random.normal(ks[2], (V, H), dtype=jnp.float32)   # PyTorch [V, H]
        return hs, g, w

    # 1) Small prefill, f32 weights, fully default tiling.
    hs, g, w = make(2, 8, 128, 512, 1)
    rtok, rlog = _reference(hs, g, w)
    tok = jax.block_until_ready(lm_head_with_topk(hs, g, w))
    assert tok.shape == (2, 8, 1) and tok.dtype == jnp.int32
    assert bool(jnp.all(tok == rtok))

    # 2) Vocab not divisible by tv (padding + index-mask path), several vocab tiles.
    hs, g, w = make(2, 8, 128, 640, 2)
    rtok, rlog = _reference(hs, g, w)
    tok = jax.block_until_ready(lm_head_with_topk(hs, g, w, tm=8, tv=256))
    assert bool(jnp.all(tok == rtok))

    # 3) Larger M exercising 128-row sub-blocking, plus the bf16-weight path.
    hs, g, w = make(2, 128, 128, 512, 3)
    rtok, rlog = _reference(hs, g, w)
    tok = jax.block_until_ready(lm_head_with_topk(hs, g, w, tm=256, tv=256))
    assert bool(jnp.all(tok == rtok))
    tok_bf16 = jax.block_until_ready(
        lm_head_with_topk(hs, g, w.astype(jnp.bfloat16), tm=256, tv=256))
    rmax = jnp.max(rlog, axis=-1, keepdims=True)
    picked = jnp.take_along_axis(rlog, tok_bf16, axis=-1)
    # bf16 quantization may flip argmax on near-ties; require near-optimal picked logits.
    assert bool(jnp.all(picked >= rmax - 5e-2))

    # 4) Row count not a multiple of the row tile (row padding path): M=18, tm=8 -> 24.
    hs, g, w = make(2, 9, 128, 512, 4)
    rtok, _ = _reference(hs, g, w)
    tok = jax.block_until_ready(lm_head_with_topk(hs, g, w, tm=8, tv=512))
    assert bool(jnp.all(tok == rtok))

    print("KERNEL_OK")
</pallas_src>

<mosaic_0001>
module attributes {stable_mosaic.version = 11 : i64} {
  func.func @_lm_head_topk_kernel(%arg0: i32, %arg1: i32, %arg2: memref<16x128xf32, #tpu.memory_space<vmem>>, %arg3: memref<1x128xf32, #tpu.memory_space<vmem>>, %arg4: memref<512x128xf32, #tpu.memory_space<vmem>>, %arg5: memref<16x1xi32, #tpu.memory_space<vmem>>, %arg6: memref<16x128xf32, #tpu.memory_space<vmem>>, %arg7: memref<16x128xf32, #tpu.memory_space<vmem>>, %arg8: memref<16x128xi32, #tpu.memory_space<vmem>>) attributes {dimension_semantics = [#tpu.dimension_semantics<parallel>, #tpu.dimension_semantics<arbitrary>], iteration_bounds = array<i64: 1, 1>, scalar_prefetch = 0 : i64, scratch_operands = 3 : i64, tpu.core_type = #tpu.core_type<tc>, window_params = [{transform_indices = @transform_0, window_bounds = array<i64: 16, 128>}, {pipeline_mode = #tpu.pipeline_mode<synchronous>, transform_indices = @transform_1, window_bounds = array<i64: 1, 128>}, {transform_indices = @transform_2, window_bounds = array<i64: 512, 128>}, {transform_indices = @transform_3, window_bounds = array<i64: 16, 1>}]} {
    %c0_i32 = arith.constant 0 : i32
    %0 = arith.cmpi eq, %arg1, %c0_i32 : i32
    %1 = arith.extui %0 : i1 to i32
    %c0_i32_0 = arith.constant 0 : i32
    %2 = arith.cmpi ne, %1, %c0_i32_0 : i32
    scf.if %2 {
      %c0_19 = arith.constant 0 : index
      %c0_20 = arith.constant 0 : index
      %47 = vector.load %arg2[%c0_19, %c0_20] : memref<16x128xf32, #tpu.memory_space<vmem>>, vector<16x128xf32>
      %48 = arith.mulf %47, %47 : vector<16x128xf32>
      %cst_21 = arith.constant dense<0.000000e+00> : vector<16xf32>
      %49 = vector.multi_reduction <add>, %48, %cst_21 [1] : vector<16x128xf32> to vector<16xf32>
      %50 = vector.shape_cast %49 : vector<16xf32> to vector<16x1xf32>
      %cst_22 = arith.constant 1.280000e+02 : f32
      %51 = vector.broadcast %cst_22 : f32 to vector<16x1xf32>
      %52 = arith.divf %50, %51 : vector<16x1xf32>
      %cst_23 = arith.constant 9.99999997E-7 : f32
      %53 = vector.broadcast %cst_23 : f32 to vector<16x1xf32>
      %54 = arith.addf %52, %53 : vector<16x1xf32>
      %55 = math.rsqrt %54 : vector<16x1xf32>
      %56 = vector.broadcast %55 : vector<16x1xf32> to vector<16x128xf32>
      %57 = arith.mulf %47, %56 : vector<16x128xf32>
      %c0_24 = arith.constant 0 : index
      %c0_25 = arith.constant 0 : index
      %58 = vector.load %arg3[%c0_24, %c0_25] : memref<1x128xf32, #tpu.memory_space<vmem>>, vector<1x128xf32>
      %59 = vector.broadcast %58 : vector<1x128xf32> to vector<16x128xf32>
      %60 = arith.mulf %57, %59 : vector<16x128xf32>
      %c0_26 = arith.constant 0 : index
      %c0_27 = arith.constant 0 : index
      %61 = vector.load %arg6[%c0_26, %c0_27] : memref<16x128xf32, #tpu.memory_space<vmem>>, vector<16x128xf32>
      tpu.vector_store %arg6[%c0_26, %c0_27], %60 {strides = array<i32>} : memref<16x128xf32, #tpu.memory_space<vmem>>, vector<16x128xf32>,
      %cst_28 = arith.constant 0xFF800000 : f32
      %62 = vector.broadcast %cst_28 : f32 to vector<16x128xf32>
      %c0_29 = arith.constant 0 : index
      %c0_30 = arith.constant 0 : index
      %63 = vector.load %arg7[%c0_29, %c0_30] : memref<16x128xf32, #tpu.memory_space<vmem>>, vector<16x128xf32>
      tpu.vector_store %arg7[%c0_29, %c0_30], %62 {strides = array<i32>} : memref<16x128xf32, #tpu.memory_space<vmem>>, vector<16x128xf32>,
      %c0_i32_31 = arith.constant 0 : i32
      %64 = vector.broadcast %c0_i32_31 : i32 to vector<16x128xi32>
      %c0_32 = arith.constant 0 : index
      %c0_33 = arith.constant 0 : index
      %65 = vector.load %arg8[%c0_32, %c0_33] : memref<16x128xi32, #tpu.memory_space<vmem>>, vector<16x128xi32>
      tpu.vector_store %arg8[%c0_32, %c0_33], %64 {strides = array<i32>} : memref<16x128xi32, #tpu.memory_space<vmem>>, vector<16x128xi32>,
    } else {
    }
    %3 = tpu.iota {dimensions = array<i32: 1>} : vector<16x128xi32>
    %c512_i32 = arith.constant 512 : i32
    %4 = arith.muli %arg1, %c512_i32 : i32
    %c0 = arith.constant 0 : index
    %c0_1 = arith.constant 0 : index
    %5 = vector.load %arg6[%c0, %c0_1] : memref<16x128xf32, #tpu.memory_space<vmem>>, vector<16x128xf32>
    %c0_2 = arith.constant 0 : index
    %c0_3 = arith.constant 0 : index
    %6 = vector.load %arg7[%c0_2, %c0_3] : memref<16x128xf32, #tpu.memory_space<vmem>>, vector<16x128xf32>
    %c0_4 = arith.constant 0 : index
    %c0_5 = arith.constant 0 : index
    %7 = vector.load %arg8[%c0_4, %c0_5] : memref<16x128xi32, #tpu.memory_space<vmem>>, vector<16x128xi32>
    %c0_6 = arith.constant 0 : index
    %c0_7 = arith.constant 0 : index
    %8 = vector.load %arg4[%c0_6, %c0_7] : memref<512x128xf32, #tpu.memory_space<vmem>>, vector<512x128xf32>
    %cst = arith.constant dense<0.000000e+00> : vector<16x512xf32>
    %9 = tpu.matmul %5, %8, %cst {dimension_numbers = #tpu.dot_dimension_numbers<[1], [1], [0], [0], [0, 0, 1, 0], [], []>} : vector<16x128xf32>, vector<512x128xf32>, vector<16x512xf32> -> vector<16x512xf32>
    %10 = vector.extract_strided_slice %9 {offsets = [0, 0], sizes = [16, 128], strides = [1, 1]} : vector<16x512xf32> to vector<16x128xf32>
    %c0_i32_8 = arith.constant 0 : i32
    %11 = arith.addi %4, %c0_i32_8 : i32
    %c0_i32_9 = arith.constant 0 : i32
    %12 = arith.addi %11, %c0_i32_9 : i32
    %13 = vector.broadcast %12 : i32 to vector<16x128xi32>
    %14 = arith.addi %3, %13 : vector<16x128xi32>
    %15 = arith.cmpf ogt, %10, %6 : vector<16x128xf32>
    %16 = arith.select %15, %14, %7 : vector<16x128xi1>, vector<16x128xi32>
    %17 = arith.select %15, %10, %6 : vector<16x128xi1>, vector<16x128xf32>
    %18 = vector.extract_strided_slice %9 {offsets = [0, 128], sizes = [16, 128], strides = [1, 1]} : vector<16x512xf32> to vector<16x128xf32>
    %c0_i32_10 = arith.constant 0 : i32
    %19 = arith.addi %4, %c0_i32_10 : i32
    %c128_i32 = arith.constant 128 : i32
    %20 = arith.addi %19, %c128_i32 : i32
    %21 = vector.broadcast %20 : i32 to vector<16x128xi32>
    %22 = arith.addi %3, %21 : vector<16x128xi32>
    %23 = arith.cmpf ogt, %18, %17 : vector<16x128xf32>
    %24 = arith.select %23, %22, %16 : vector<16x128xi1>, vector<16x128xi32>
    %25 = arith.select %23, %18, %17 : vector<16x128xi1>, vector<16x128xf32>
    %26 = vector.extract_strided_slice %9 {offsets = [0, 256], sizes = [16, 128], strides = [1, 1]} : vector<16x512xf32> to vector<16x128xf32>
    %c0_i32_11 = arith.constant 0 : i32
    %27 = arith.addi %4, %c0_i32_11 : i32
    %c256_i32 = arith.constant 256 : i32
    %28 = arith.addi %27, %c256_i32 : i32
    %29 = vector.broadcast %28 : i32 to vector<16x128xi32>
    %30 = arith.addi %3, %29 : vector<16x128xi32>
    %31 = arith.cmpf ogt, %26, %25 : vector<16x128xf32>
    %32 = arith.select %31, %30, %24 : vector<16x128xi1>, vector<16x128xi32>
    %33 = arith.select %31, %26, %25 : vector<16x128xi1>, vector<16x128xf32>
    %34 = vector.extract_strided_slice %9 {offsets = [0, 384], sizes = [16, 128], strides = [1, 1]} : vector<16x512xf32> to vector<16x128xf32>
    %c0_i32_12 = arith.constant 0 : i32
    %35 = arith.addi %4, %c0_i32_12 : i32
    %c384_i32 = arith.constant 384 : i32
    %36 = arith.addi %35, %c384_i32 : i32
    %37 = vector.broadcast %36 : i32 to vector<16x128xi32>
    %38 = arith.addi %3, %37 : vector<16x128xi32>
    %39 = arith.cmpf ogt, %34, %33 : vector<16x128xf32>
    %40 = arith.select %39, %38, %32 : vector<16x128xi1>, vector<16x128xi32>
    %41 = arith.select %39, %34, %33 : vector<16x128xi1>, vector<16x128xf32>
    %c0_13 = arith.constant 0 : index
    %c0_14 = arith.constant 0 : index
    %42 = vector.load %arg7[%c0_13, %c0_14] : memref<16x128xf32, #tpu.memory_space<vmem>>, vector<16x128xf32>
    tpu.vector_store %arg7[%c0_13, %c0_14], %41 {strides = array<i32>} : memref<16x128xf32, #tpu.memory_space<vmem>>, vector<16x128xf32>,
    %c0_15 = arith.constant 0 : index
    %c0_16 = arith.constant 0 : index
    %43 = vector.load %arg8[%c0_15, %c0_16] : memref<16x128xi32, #tpu.memory_space<vmem>>, vector<16x128xi32>
    tpu.vector_store %arg8[%c0_15, %c0_16], %40 {strides = array<i32>} : memref<16x128xi32, #tpu.memory_space<vmem>>, vector<16x128xi32>,
    %c0_i32_17 = arith.constant 0 : i32
    %44 = arith.cmpi eq, %arg1, %c0_i32_17 : i32
    %45 = arith.extui %44 : i1 to i32
    %c0_i32_18 = arith.constant 0 : i32
    %46 = arith.cmpi ne, %45, %c0_i32_18 : i32
    scf.if %46 {
      %c0_19 = arith.constant 0 : index
      %c0_20 = arith.constant 0 : index
      %47 = vector.load %arg7[%c0_19, %c0_20] : memref<16x128xf32, #tpu.memory_space<vmem>>, vector<16x128xf32>
      %c0_21 = arith.constant 0 : index
      %c0_22 = arith.constant 0 : index
      %48 = vector.load %arg8[%c0_21, %c0_22] : memref<16x128xi32, #tpu.memory_space<vmem>>, vector<16x128xi32>
      %cst_23 = arith.constant dense<0xFF800000> : vector<16xf32>
      %49 = vector.multi_reduction <maximumf>, %47, %cst_23 [1] : vector<16x128xf32> to vector<16xf32>
      %50 = vector.shape_cast %49 : vector<16xf32> to vector<16x1xf32>
      %51 = vector.broadcast %50 : vector<16x1xf32> to vector<16x128xf32>
      %52 = arith.cmpf oeq, %47, %51 : vector<16x128xf32>
      %c2147483647_i32 = arith.constant 2147483647 : i32
      %53 = vector.broadcast %c2147483647_i32 : i32 to vector<16x128xi32>
      %54 = arith.select %52, %48, %53 : vector<16x128xi1>, vector<16x128xi32>
      %cst_24 = arith.constant dense<2147483647> : vector<16xi32>
      %55 = vector.multi_reduction <minsi>, %54, %cst_24 [1] : vector<16x128xi32> to vector<16xi32>
      %56 = vector.shape_cast %55 : vector<16xi32> to vector<16x1xi32>
      %c0_25 = arith.constant 0 : index
      %c0_26 = arith.constant 0 : index
      %57 = vector.load %arg5[%c0_25, %c0_26] : memref<16x1xi32, #tpu.memory_space<vmem>>, vector<16x1xi32>
      tpu.vector_store %arg5[%c0_25, %c0_26], %56 {strides = array<i32>} : memref<16x1xi32, #tpu.memory_space<vmem>>, vector<16x1xi32>,
    } else {
    }
    return
  }
  func.func @transform_0(%arg0: i32, %arg1: i32) -> (i32, i32) {
    %c0_i32 = arith.constant 0 : i32
    %c0_i32_0 = arith.constant 0 : i32
    return %arg0, %c0_i32 : i32, i32
  }
  func.func @transform_1(%arg0: i32, %arg1: i32) -> (i32, i32) {
    %c0_i32 = arith.constant 0 : i32
    %c0_i32_0 = arith.constant 0 : i32
    %c0_i32_1 = arith.constant 0 : i32
    return %c0_i32, %c0_i32_0 : i32, i32
  }
  func.func @transform_2(%arg0: i32, %arg1: i32) -> (i32, i32) {
    %c0_i32 = arith.constant 0 : i32
    %c0_i32_0 = arith.constant 0 : i32
    return %arg1, %c0_i32 : i32, i32
  }
  func.func @transform_3(%arg0: i32, %arg1: i32) -> (i32, i32) {
    %c0_i32 = arith.constant 0 : i32
    %c0_i32_0 = arith.constant 0 : i32
    return %arg0, %c0_i32 : i32, i32
  }
}

</mosaic_0001>

<llo_original>
// kernel: tpu_custom_call.1
$region0: #{tpu_custom_call.1}
  #allocation0 [shape = 'u32[]', space=smem, size = 0x4, offset = 0x4, fixed_abs, tag = 'smem constant byte address 0x4 - core index']
  #allocation1 [shape = 'u32[72,128]{1,0:T(1,128)}', space=vmem, size = 0x9000, scoped, tag = 'internal scratch']
  #allocation2 [shape = 'f32[16,128]{1,0:T(8,128)}', space=vmem, size = 0x2000, scoped, tag = 'scratch operand']
  #allocation3 [shape = 'f32[16,128]{1,0:T(8,128)}', space=vmem, size = 0x2000, scoped, tag = 'scratch operand']
  #allocation4 [shape = 's32[16,128]{1,0:T(8,128)}', space=vmem, size = 0x2000, scoped, tag = 'scratch operand']
  %s0 = inlined_call_operand.hbm [shape: f32[16,128], index: 0, kind: input, shape index: {}]
  %s1 = inlined_call_operand.hbm [shape: f32[1,128], index: 1, kind: input, shape index: {}]
  %s2 = inlined_call_operand.hbm [shape: f32[512,128], index: 2, kind: input, shape index: {}]
  %s3 = inlined_call_operand.vmem [shape: s32[16,1], index: 3, kind: output, shape index: {}]
  %s4 = sld [smem:[#allocation0]]
  $region42: #{tpu_custom_call.1} parent=0
    _
  %s6 = ssub.s32 1, %s4
  %s7 = scalar_select 0, %s6, %s4
  $region1: #{tpu_custom_call.1} parent=0
    #allocation5 [shape = 'u8[8192]{0}', space=vmem, size = 0x2000, scoped, tag = 'input window, operand 0, single buffered']
    #allocation6 [shape = 's32[1]{0}', space=sflag, size = 0x4, scoped, tag = 'scoped memory for tpu_custom_call.1']
    #allocation7 [shape = 'u8[512]{0}', space=vmem, size = 0x400, scoped, tag = 'input window, operand 1, single buffered']
    #allocation8 [shape = 's32[1]{0}', space=sflag, size = 0x4, scoped, tag = 'scoped memory for tpu_custom_call.1']
    #allocation9 [shape = 'u8[262144]{0}', space=vmem, size = 0x40000, scoped, tag = 'input window, operand 2, single buffered']
    %8 = vsyncpa [#allocation6], 0
    %9 = vsyncpa [#allocation8], 0
    // Predicated region
    $region2: #{tpu_custom_call.1} parent=1 // pred_check
      _
    $region3: #{tpu_custom_call.1} parent=1 // pred_check_branch
      %11 = sbr.rel (0) target = $region5
    $region4: #{tpu_custom_call.1} parent=1 // pred_region
      %13 = vsyncadd [#allocation6], 0
      %s14 = sshll.u32 %s0, 4
      %s15 = int_to_ptr.hbm [resolvable:$true] %s14
      %s16 = sshll.u32 [#allocation5], 4
      %s17 = int_to_ptr.vmem [resolvable:$true] %s16
      %22 = dma.hbm_to_vmem [thread:$0]  %s15, 256, %s17, [#allocation6], 128, 128, 8
    $region5: #{tpu_custom_call.1} parent=1 // pred_fallthru
      _
    // Predicated region
    $region6: #{tpu_custom_call.1} parent=1 // pred_check
      _
    $region7: #{tpu_custom_call.1} parent=1 // pred_check_branch
      %24 = sbr.rel (0) target = $region9
    $region8: #{tpu_custom_call.1} parent=1 // pred_region
      %26 = vsyncadd [#allocation8], 0
      %s28 = sshll.u32 %s1, 4
      %s29 = int_to_ptr.hbm [resolvable:$true] %s28
      %s30 = sshll.u32 [#allocation7], 4
      %s31 = int_to_ptr.vmem [resolvable:$true] %s30
      %33 = dma.hbm_to_vmem [thread:$0]  %s29, 16, %s31, [#allocation8]
    $region9: #{tpu_custom_call.1} parent=1 // pred_fallthru
      _
    // Predicated region
    $region10: #{tpu_custom_call.1} parent=1 // pred_check
      _
    $region11: #{tpu_custom_call.1} parent=1 // pred_check_branch
      %35 = sbr.rel (0) target = $region13
    $region12: #{tpu_custom_call.1} parent=1 // pred_region
      %37 = vsyncadd [#allocation8], 0
      %s38 = sshll.u32 %s2, 4
      %s39 = int_to_ptr.hbm [resolvable:$true] %s38
      %s40 = sshll.u32 [#allocation9], 4
      %s41 = int_to_ptr.vmem [resolvable:$true] %s40
      %46 = dma.hbm_to_vmem [thread:$0]  %s39, 8192, %s41, [#allocation8], 128, 128, 8
    $region13: #{tpu_custom_call.1} parent=1 // pred_fallthru
      _
    // Predicated region
    $region14: #{tpu_custom_call.1} parent=1 // pred_check
      _
    $region15: #{tpu_custom_call.1} parent=1 // pred_check_branch
      %48 = sbr.rel (0) target = $region17
    $region16: #{tpu_custom_call.1} parent=1 // pred_region
      %50 = dma.done [#allocation6], 256
    $region17: #{tpu_custom_call.1} parent=1 // pred_fallthru
      _
    // Predicated region
    $region18: #{tpu_custom_call.1} parent=1 // pred_check
      _
    $region19: #{tpu_custom_call.1} parent=1 // pred_check_branch
      %52 = sbr.rel (0) target = $region21
    $region20: #{tpu_custom_call.1} parent=1 // pred_region
      %54 = dma.done [#allocation8], 16
    $region21: #{tpu_custom_call.1} parent=1 // pred_fallthru
      _
    // Predicated region
    $region22: #{tpu_custom_call.1} parent=1 // pred_check
      _
    $region23: #{tpu_custom_call.1} parent=1 // pred_check_branch
      %56 = sbr.rel (0) target = $region25
    $region24: #{tpu_custom_call.1} parent=1 // pred_region
      %58 = dma.done [#allocation8], 8192
    $region25: #{tpu_custom_call.1} parent=1 // pred_fallthru
      _
    %p59 = scmp.eq.s32.totalorder 0, 0
    // Predicated region
    $region26: #{tpu_custom_call.1} parent=1 // pred_check
      %p60 = pneg %p59
    $region27: #{tpu_custom_call.1} parent=1 // pred_check_branch
      %62 = sbr.rel (%p60) target = $region29
    $region28: #{tpu_custom_call.1} parent=1 // pred_region
      %v63 = vld [vmem:[#allocation5] sm:$0xff]
      %v64 = vld [vmem:[#allocation5 + $0x8] sm:$0xff]
      %v65 = vmul.f32 %v63, %v63
      %v66 = vmul.f32 %v64, %v64
      %67 = vadd.xlane.f32.xlu0 %v65
      %v68 = vpop.xlane.xlu0 %67
      %69 = vadd.xlane.f32.xlu0 %v66
      %v70 = vpop.xlane.xlu0 %69
      %v71 = vrcp.pop 128.0
      %v72 = vmul.f32 128.0, %v71
      %v73 = vsub.f32 1.0, %v72
      %v74 = vmul.f32 %v71, %v73
      %v75 = vadd.f32 %v71, %v74
      %vm76 = vweird.f32 %v71
      %v77 = vsel %vm76, %v71, %v75
      %v78 = vmul.f32 %v68, %v77
      %v79 = vmul.f32 %v70, %v77
      %v80 = vadd.f32 %v78, 1e-06
      %v81 = vadd.f32 %v79, 1e-06
      %v82 = vrsqrt.pop %v80
      %v83 = vmul.f32 %v82, %v80
      %v84 = vmul.f32 %v83, %v82
      %v85 = vmul.f32 0.5, %v84
      %v86 = vsub.f32 1.5, %v85
      %v87 = vmul.f32 %v82, %v86
      %vm88 = vweird.f32 %v80
      %vm89 = vweird.f32 %v82
      %vm90 = vmor %vm88, %vm89
      %v91 = vsel %vm90, %v82, %v87
      %v92 = vrsqrt.pop %v81
      %v93 = vmul.f32 %v92, %v81
      %v94 = vmul.f32 %v93, %v92
      %v95 = vmul.f32 0.5, %v94
      %v96 = vsub.f32 1.5, %v95
      %v97 = vmul.f32 %v92, %v96
      %vm98 = vweird.f32 %v81
      %vm99 = vweird.f32 %v92
      %vm100 = vmor %vm98, %vm99
      %v101 = vsel %vm100, %v92, %v97
      %v102 = vmul.f32 %v63, %v91
      %v103 = vmul.f32 %v64, %v101
      %v104 = vld [vmem:[#allocation7] sm:$0x1]
      %v106 = vperm.slane %v104, 0
      %v108 = vmul.f32 %v102, %v106
      %v109 = vmul.f32 %v103, %v106
      %110 = vst [vmem:[#allocation2] sm:$0xff] %v108
      %111 = vst [vmem:[#allocation2 + $0x8] sm:$0xff] %v109
      %112 = vst [vmem:[#allocation3] sm:$0xff] -inf
      %113 = vst [vmem:[#allocation3 + $0x8] sm:$0xff] -inf
      %114 = vst [vmem:[#allocation4] sm:$0xff] 0
      %115 = vst [vmem:[#allocation4 + $0x8] sm:$0xff] 0
    $region29: #{tpu_custom_call.1} parent=1 // pred_fallthru
      _
    %v116 = vlaneseq
    %v117 = vand.u32 %v116, 127
    %s118 = smul.u32 0, 512
    %v119 = vld [vmem:[#allocation2] sm:$0xff]
    %v120 = vld [vmem:[#allocation2 + $0x8] sm:$0xff]
    %v121 = vld [vmem:[#allocation3] sm:$0xff]
    %v122 = vld [vmem:[#allocation3 + $0x8] sm:$0xff]
    %v123 = vld [vmem:[#allocation4] sm:$0xff]
    %v124 = vld [vmem:[#allocation4 + $0x8] sm:$0xff]
    %v125 = vld [vmem:[#allocation9] sm:$0xff]
    %v126 = vld [vmem:[#allocation9 + $0x8] sm:$0xff]
    %v127 = vld [vmem:[#allocation9 + $0x10] sm:$0xff]
    %v128 = vld [vmem:[#allocation9 + $0x18] sm:$0xff]
    %v129 = vld [vmem:[#allocation9 + $0x20] sm:$0xff]
    %v130 = vld [vmem:[#allocation9 + $0x28] sm:$0xff]
    %v131 = vld [vmem:[#allocation9 + $0x30] sm:$0xff]
    %v132 = vld [vmem:[#allocation9 + $0x38] sm:$0xff]
    %v133 = vld [vmem:[#allocation9 + $0x40] sm:$0xff]
    %v134 = vld [vmem:[#allocation9 + $0x48] sm:$0xff]
    %v135 = vld [vmem:[#allocation9 + $0x50] sm:$0xff]
    %v136 = vld [vmem:[#allocation9 + $0x58] sm:$0xff]
    %v137 = vld [vmem:[#allocation9 + $0x60] sm:$0xff]
    %v138 = vld [vmem:[#allocation9 + $0x68] sm:$0xff]
    %v139 = vld [vmem:[#allocation9 + $0x70] sm:$0xff]
    %v140 = vld [vmem:[#allocation9 + $0x78] sm:$0xff]
    %v141 = vld [vmem:[#allocation9 + $0x80] sm:$0xff]
    %v142 = vld [vmem:[#allocation9 + $0x88] sm:$0xff]
    %v143 = vld [vmem:[#allocation9 + $0x90] sm:$0xff]
    %v144 = vld [vmem:[#allocation9 + $0x98] sm:$0xff]
    %v145 = vld [vmem:[#allocation9 + $0xa0] sm:$0xff]
    %v146 = vld [vmem:[#allocation9 + $0xa8] sm:$0xff]
    %v147 = vld [vmem:[#allocation9 + $0xb0] sm:$0xff]
    %v148 = vld [vmem:[#allocation9 + $0xb8] sm:$0xff]
    %v149 = vld [vmem:[#allocation9 + $0xc0] sm:$0xff]
    %v150 = vld [vmem:[#allocation9 + $0xc8] sm:$0xff]
    %v151 = vld [vmem:[#allocation9 + $0xd0] sm:$0xff]
    %v152 = vld [vmem:[#allocation9 + $0xd8] sm:$0xff]
    %v153 = vld [vmem:[#allocation9 + $0xe0] sm:$0xff]
    %v154 = vld [vmem:[#allocation9 + $0xe8] sm:$0xff]
    %v155 = vld [vmem:[#allocation9 + $0xf0] sm:$0xff]
    %v156 = vld [vmem:[#allocation9 + $0xf8] sm:$0xff]
    %v157 = vld [vmem:[#allocation9 + $0x100] sm:$0xff]
    %v158 = vld [vmem:[#allocation9 + $0x108] sm:$0xff]
    %v159 = vld [vmem:[#allocation9 + $0x110] sm:$0xff]
    %v160 = vld [vmem:[#allocation9 + $0x118] sm:$0xff]
    %v161 = vld [vmem:[#allocation9 + $0x120] sm:$0xff]
    %v162 = vld [vmem:[#allocation9 + $0x128] sm:$0xff]
    %v163 = vld [vmem:[#allocation9 + $0x130] sm:$0xff]
    %v164 = vld [vmem:[#allocation9 + $0x138] sm:$0xff]
    %v165 = vld [vmem:[#allocation9 + $0x140] sm:$0xff]
    %v166 = vld [vmem:[#allocation9 + $0x148] sm:$0xff]
    %v167 = vld [vmem:[#allocation9 + $0x150] sm:$0xff]
    %v168 = vld [vmem:[#allocation9 + $0x158] sm:$0xff]
    %v169 = vld [vmem:[#allocation9 + $0x160] sm:$0xff]
    %v170 = vld [vmem:[#allocation9 + $0x168] sm:$0xff]
    %v171 = vld [vmem:[#allocation9 + $0x170] sm:$0xff]
    %v172 = vld [vmem:[#allocation9 + $0x178] sm:$0xff]
    %v173 = vld [vmem:[#allocation9 + $0x180] sm:$0xff]
    %v174 = vld [vmem:[#allocation9 + $0x188] sm:$0xff]
    %v175 = vld [vmem:[#allocation9 + $0x190] sm:$0xff]
    %v176 = vld [vmem:[#allocation9 + $0x198] sm:$0xff]
    %v177 = vld [vmem:[#allocation9 + $0x1a0] sm:$0xff]
    %v178 = vld [vmem:[#allocation9 + $0x1a8] sm:$0xff]
    %v179 = vld [vmem:[#allocation9 + $0x1b0] sm:$0xff]
    %v180 = vld [vmem:[#allocation9 + $0x1b8] sm:$0xff]
    %v181 = vld [vmem:[#allocation9 + $0x1c0] sm:$0xff]
    %v182 = vld [vmem:[#allocation9 + $0x1c8] sm:$0xff]
    %v183 = vld [vmem:[#allocation9 + $0x1d0] sm:$0xff]
    %v184 = vld [vmem:[#allocation9 + $0x1d8] sm:$0xff]
    %v185 = vld [vmem:[#allocation9 + $0x1e0] sm:$0xff]
    %v186 = vld [vmem:[#allocation9 + $0x1e8] sm:$0xff]
    %v187 = vld [vmem:[#allocation9 + $0x1f0] sm:$0xff]
    %v188 = vld [vmem:[#allocation9 + $0x1f8] sm:$0xff]
    %189 = vmatpush.xpose.msra.mxu0 %v140
    %190 = vmatpush.xpose.msra.mxu0 %v139
    %191 = vmatpush.xpose.msra.mxu0 %v138
    %192 = vmatpush.xpose.msra.mxu0 %v137
    %193 = vmatpush.xpose.msra.mxu0 %v136
    %194 = vmatpush.xpose.msra.mxu0 %v135
    %195 = vmatpush.xpose.msra.mxu0 %v134
    %196 = vmatpush.xpose.msra.mxu0 %v133
    %197 = vmatpush.xpose.msra.mxu0 %v132
    %198 = vmatpush.xpose.msra.mxu0 %v131
    %199 = vmatpush.xpose.msra.mxu0 %v130
    %200 = vmatpush.xpose.msra.mxu0 %v129
    %201 = vmatpush.xpose.msra.mxu0 %v128
    %202 = vmatpush.xpose.msra.mxu0 %v127
    %203 = vmatpush.xpose.msra.mxu0 %v126
    %204 = vmatpush.xpose.msra.mxu0 %v125
    %205 = vmatmul.f32.gmra.mxu0 %v119
    %v206 = vpop.f32.mrf.mxu0
    %v207 = vadd.f32 0.0, %v206
    %208 = vmatmul.f32.gmra.mxu0 %v120
    %v209 = vpop.f32.mrf.mxu0
    %v210 = vadd.f32 0.0, %v209
    %211 = vdwg.mxu0
    %212 = vmatpush.xpose.msra.mxu0 %v156
    %213 = vmatpush.xpose.msra.mxu0 %v155
    %214 = vmatpush.xpose.msra.mxu0 %v154
    %215 = vmatpush.xpose.msra.mxu0 %v153
    %216 = vmatpush.xpose.msra.mxu0 %v152
    %217 = vmatpush.xpose.msra.mxu0 %v151
    %218 = vmatpush.xpose.msra.mxu0 %v150
    %219 = vmatpush.xpose.msra.mxu0 %v149
    %220 = vmatpush.xpose.msra.mxu0 %v148
    %221 = vmatpush.xpose.msra.mxu0 %v147
    %222 = vmatpush.xpose.msra.mxu0 %v146
    %223 = vmatpush.xpose.msra.mxu0 %v145
    %224 = vmatpush.xpose.msra.mxu0 %v144
    %225 = vmatpush.xpose.msra.mxu0 %v143
    %226 = vmatpush.xpose.msra.mxu0 %v142
    %227 = vmatpush.xpose.msra.mxu0 %v141
    %228 = vmatmul.f32.gmra.mxu0 %v119
    %v229 = vpop.f32.mrf.mxu0
    %v230 = vadd.f32 0.0, %v229
    %231 = vmatmul.f32.gmra.mxu0 %v120
    %v232 = vpop.f32.mrf.mxu0
    %v233 = vadd.f32 0.0, %v232
    %234 = vdwg.mxu0
    %235 = vmatpush.xpose.msra.mxu0 %v172
    %236 = vmatpush.xpose.msra.mxu0 %v171
    %237 = vmatpush.xpose.msra.mxu0 %v170
    %238 = vmatpush.xpose.msra.mxu0 %v169
    %239 = vmatpush.xpose.msra.mxu0 %v168
    %240 = vmatpush.xpose.msra.mxu0 %v167
    %241 = vmatpush.xpose.msra.mxu0 %v166
    %242 = vmatpush.xpose.msra.mxu0 %v165
    %243 = vmatpush.xpose.msra.mxu0 %v164
    %244 = vmatpush.xpose.msra.mxu0 %v163
    %245 = vmatpush.xpose.msra.mxu0 %v162
    %246 = vmatpush.xpose.msra.mxu0 %v161
    %247 = vmatpush.xpose.msra.mxu0 %v160
    %248 = vmatpush.xpose.msra.mxu0 %v159
    %249 = vmatpush.xpose.msra.mxu0 %v158
    %250 = vmatpush.xpose.msra.mxu0 %v157
    %251 = vmatmul.f32.gmra.mxu0 %v119
    %v252 = vpop.f32.mrf.mxu0
    %v253 = vadd.f32 0.0, %v252
    %254 = vmatmul.f32.gmra.mxu0 %v120
    %v255 = vpop.f32.mrf.mxu0
    %v256 = vadd.f32 0.0, %v255
    %257 = vdwg.mxu0
    %258 = vmatpush.xpose.msra.mxu0 %v188
    %259 = vmatpush.xpose.msra.mxu0 %v187
    %260 = vmatpush.xpose.msra.mxu0 %v186
    %261 = vmatpush.xpose.msra.mxu0 %v185
    %262 = vmatpush.xpose.msra.mxu0 %v184
    %263 = vmatpush.xpose.msra.mxu0 %v183
    %264 = vmatpush.xpose.msra.mxu0 %v182
    %265 = vmatpush.xpose.msra.mxu0 %v181
    %266 = vmatpush.xpose.msra.mxu0 %v180
    %267 = vmatpush.xpose.msra.mxu0 %v179
    %268 = vmatpush.xpose.msra.mxu0 %v178
    %269 = vmatpush.xpose.msra.mxu0 %v177
    %270 = vmatpush.xpose.msra.mxu0 %v176
    %271 = vmatpush.xpose.msra.mxu0 %v175
    %272 = vmatpush.xpose.msra.mxu0 %v174
    %273 = vmatpush.xpose.msra.mxu0 %v173
    %274 = vmatmul.f32.gmra.mxu0 %v119
    %v275 = vpop.f32.mrf.mxu0
    %v276 = vadd.f32 0.0, %v275
    %277 = vmatmul.f32.gmra.mxu0 %v120
    %v278 = vpop.f32.mrf.mxu0
    %v279 = vadd.f32 0.0, %v278
    %280 = vdwg.mxu0
    %v281 = vstv %s118
    %v282 = vadd.s32 %v117, %v281
    %vm283 = vcmp.gt.f32.partialorder %v207, %v121
    %vm284 = vcmp.gt.f32.partialorder %v210, %v122
    %v285 = vsel %vm283, %v282, %v123
    %v286 = vsel %vm284, %v282, %v124
    %v287 = vsel %vm283, %v207, %v121
    %v288 = vsel %vm284, %v210, %v122
    %s289 = sadd.s32 %s118, 128
    %v290 = vstv %s289
    %v291 = vadd.s32 %v117, %v290
    %vm292 = vcmp.gt.f32.partialorder %v230, %v287
    %vm293 = vcmp.gt.f32.partialorder %v233, %v288
    %v294 = vsel %vm292, %v291, %v285
    %v295 = vsel %vm293, %v291, %v286
    %v296 = vsel %vm292, %v230, %v287
    %v297 = vsel %vm293, %v233, %v288
    %s298 = sadd.s32 %s118, 256
    %v299 = vstv %s298
    %v300 = vadd.s32 %v117, %v299
    %vm301 = vcmp.gt.f32.partialorder %v253, %v296
    %vm302 = vcmp.gt.f32.partialorder %v256, %v297
    %v303 = vsel %vm301, %v300, %v294
    %v304 = vsel %vm302, %v300, %v295
    %v305 = vsel %vm301, %v253, %v296
    %v306 = vsel %vm302, %v256, %v297
    %s307 = sadd.s32 %s118, 384
    %v308 = vstv %s307
    %v309 = vadd.s32 %v117, %v308
    %vm310 = vcmp.gt.f32.partialorder %v276, %v305
    %vm311 = vcmp.gt.f32.partialorder %v279, %v306
    %v312 = vsel %vm310, %v309, %v303
    %v313 = vsel %vm311, %v309, %v304
    %v314 = vsel %vm310, %v276, %v305
    %v315 = vsel %vm311, %v279, %v306
    %316 = vst [vmem:[#allocation3] sm:$0xff] %v314
    %317 = vst [vmem:[#allocation3 + $0x8] sm:$0xff] %v315
    %318 = vst [vmem:[#allocation4] sm:$0xff] %v312
    %319 = vst [vmem:[#allocation4 + $0x8] sm:$0xff] %v313
    // Predicated region
    $region30: #{tpu_custom_call.1} parent=1 // pred_check
      %p320 = pneg %p59
    $region31: #{tpu_custom_call.1} parent=1 // pred_check_branch
      %322 = sbr.rel (%p320) target = $region33
    $region32: #{tpu_custom_call.1} parent=1 // pred_region
      %v323 = vld [vmem:[#allocation3] sm:$0xff]
      %v324 = vld [vmem:[#allocation3 + $0x8] sm:$0xff]
      %v325 = vld [vmem:[#allocation4] sm:$0xff]
      %v326 = vld [vmem:[#allocation4 + $0x8] sm:$0xff]
      %327 = vmax.xlane.f32.xlu0 %v323
      %v328 = vpop.xlane.xlu0 %327
      %329 = vmax.xlane.f32.xlu0 %v324
      %v330 = vpop.xlane.xlu0 %329
      %vm331 = vcmp.eq.f32.partialorder %v323, %v328
      %vm332 = vcmp.eq.f32.partialorder %v324, %v330
      %v333 = vsel %vm331, %v325, 2147483647
      %v334 = vsel %vm332, %v326, 2147483647
      %v335 = vand.u32 %v333, 65535
      %v336 = vshra.s32 %v333, 16
      %v337 = vcvt.s32.f32 %v335
      %v338 = vcvt.s32.f32 %v336
      %339 = vmin.xlane.f32.xlu0 %v338
      %v340 = vpop.xlane.xlu0 %339
      %vm341 = vcmp.eq.f32.partialorder %v338, %v340
      %v342 = vsel %vm341, %v337, inf
      %343 = vmin.xlane.f32.xlu0 %v342
      %v344 = vpop.xlane.xlu0 %343
      %v345 = vcvt.f32.s32 %v344
      %v346 = vcvt.f32.s32 %v340
      %v347 = vshll.u32 %v346, 16
      %v348 = vadd.s32 %v347, %v345
      %v349 = vand.u32 %v334, 65535
      %v350 = vshra.s32 %v334, 16
      %v351 = vcvt.s32.f32 %v349
      %v352 = vcvt.s32.f32 %v350
      %353 = vmin.xlane.f32.xlu0 %v352
      %v354 = vpop.xlane.xlu0 %353
      %vm355 = vcmp.eq.f32.partialorder %v352, %v354
      %v356 = vsel %vm355, %v351, inf
      %357 = vmin.xlane.f32.xlu0 %v356
      %v358 = vpop.xlane.xlu0 %357
      %v359 = vcvt.f32.s32 %v358
      %v360 = vcvt.f32.s32 %v354
      %v361 = vshll.u32 %v360, 16
      %v362 = vadd.s32 %v361, %v359
      %vm363 = vcmask 7168
      %364 = vst.msk [vmem:[%s3] sm:$0xff] %vm363, %v348
      %365 = vst.msk [vmem:[%s3 + $0x8] sm:$0xff] %vm363, %v362
    $region33: #{tpu_custom_call.1} parent=1 // pred_fallthru
      _
    // Predicated region
    $region34: #{tpu_custom_call.1} parent=1 // pred_check
      _
    $region35: #{tpu_custom_call.1} parent=1 // pred_check_branch
      %367 = sbr.rel (0) target = $region37
    $region36: #{tpu_custom_call.1} parent=1 // pred_region
      _
    $region37: #{tpu_custom_call.1} parent=1 // pred_fallthru
      _
    // Predicated region
    $region38: #{tpu_custom_call.1} parent=1 // pred_check
      _
    $region39: #{tpu_custom_call.1} parent=1 // pred_check_branch
      %369 = sbr.rel (0) target = $region41
    $region40: #{tpu_custom_call.1} parent=1 // pred_region
      _
    $region41: #{tpu_custom_call.1} parent=1 // pred_fallthru
      _
    %370 = vsyncpa [#allocation6], 1
    %371 = vsyncpa [#allocation8], 1

</llo_original>
